<compile_context>
chip_gen: v7x
topology: tpu7x:2x2x1
jax: 0.10.0
libtpu: 0.0.40
codegen_flags: <defaults>
</compile_context>

<pallas_src>
import functools

import jax
import jax.numpy as jnp
from jax.experimental import pallas as pl
from jax.experimental.pallas import tpu as pltpu


def _round_up(x, m):
    return ((x + m - 1) // m) * m


def _vmem_capacity_bytes():
    try:
        info = pltpu.get_tpu_info()
        cap = getattr(info, "vmem_capacity_bytes", None)
        if cap:
            return int(cap)
    except Exception:
        pass
    return 64 << 20  # conservative default: v7x per-TensorCore VMEM


@functools.lru_cache(maxsize=None)
def _tile_config():
    # Generation-keyed tile sizes: v5e/v6e have 128 MiB VMEM per core -> large
    # tiles amortize the ~0.35us per-grid-step overhead; v7x has 64 MiB -> cap
    # the (tn x tv) one-hot / score intermediates.
    if _vmem_capacity_bytes() >= (96 << 20):
        return {"sm_tn": 1024, "sm_tv": 2048, "nn_tn": 1024, "nn_tv": 2048}
    return {"sm_tn": 512, "sm_tv": 1024, "nn_tn": 512, "nn_tv": 1024}


def _vmem_limit(est_bytes):
    cap = _vmem_capacity_bytes()
    return int(min(max(2 * est_bytes + (4 << 20), 32 << 20), (cap * 3) // 4))


def _bucket_rows(n, t_max):
    # pow2 bucketing below the tile cap keeps shapes (hence Mosaic compiles)
    # stable across batches; above it, buckets of t_max rows.
    t = min(t_max, max(8, pl.next_power_of_2(max(n, 1))))
    return t, _round_up(max(n, 1), t)


def _bucket_segments(v, t_max):
    t = min(t_max, max(128, pl.next_power_of_2(max(v, 1))))
    return t, _round_up(max(v, 1), t)


# ----------------------------------------------------------------------------
# Fused ReLU + 1x1-conv projection
# ----------------------------------------------------------------------------
def _relu_proj_kernel(x_ref, w_ref, o_ref):
    # y = relu(x) @ W^T  ==  nn.ReLU() + nn.Conv1d(Fin, Fout, k=1, bias=False).
    # ReLU in f32 (v5e VPU has no bf16 max), matmul on the bf16 MXU path,
    # accumulation in f32, bf16 stores.
    x = jnp.maximum(x_ref[...].astype(jnp.float32), 0.0)
    y = jax.lax.dot_general(
        x.astype(w_ref.dtype), w_ref[...],
        dimension_numbers=(((1,), (1,)), ((), ())),
        preferred_element_type=jnp.float32)
    o_ref[...] = y.astype(o_ref.dtype)


def relu_proj(x, w, *, tm_max=2048):
    """Row-tiled relu+matmul; bf16 I/O, lane-dense (>=128 col) output.

    No pre-pad copy of the activations: grid = cdiv(n, tm) and the ragged last
    row tile is masked by Pallas.  Weight block stays VMEM-resident.
    """
    n, f_in = x.shape
    f_out = w.shape[0]                        # padded to a 128 multiple by caller
    x = x.astype(jnp.bfloat16)
    tm = min(tm_max, _round_up(max(n, 1), 8))
    est = (2 * tm * f_in * 2 + f_out * f_in * 2
           + 2 * tm * f_out * 2 + tm * f_out * 4)
    out = pl.pallas_call(
        _relu_proj_kernel,
        out_shape=jax.ShapeDtypeStruct((n, f_out), jnp.bfloat16),
        grid=(pl.cdiv(n, tm),),
        in_specs=[pl.BlockSpec((tm, f_in), lambda i: (i, 0)),
                  pl.BlockSpec((f_out, f_in), lambda i: (0, 0))],
        out_specs=pl.BlockSpec((tm, f_out), lambda i: (i, 0)),
        compiler_params=pltpu.CompilerParams(
            dimension_semantics=("parallel",),
            vmem_limit_bytes=_vmem_limit(est)),
    )(x, w)
    return out


# ----------------------------------------------------------------------------
# Scatter-mean (segment-tiled one-hot matmul with per-tile accumulator)
# ----------------------------------------------------------------------------
def _scatter_mean_kernel(x_ref, idx_ref, o_ref, acc_ref, *, f, tv, init_val):
    # torch_scatter.scatter(x, idx, dim=0, out=out0, reduce='mean'):
    #   out = (out0 + segment_sum(x)) / clamp(count, min=1)
    # init_val=0.0 -> plain scatter-mean; init_val=1.0 -> out0 = torch.ones(..).
    sv = pl.program_id(0)                 # segment-tile axis ('parallel')
    r = pl.program_id(1)                  # row axis (reduction, 'arbitrary')

    @pl.when(r == 0)
    def _init():
        acc_ref[...] = jnp.zeros_like(acc_ref)

    x_aug = x_ref[...]                                    # (tn, f+1), last col=1
    tn = x_aug.shape[0]
    local = idx_ref[...] - sv * tv                        # (tn, 1)
    onehot = (jax.lax.broadcasted_iota(jnp.int32, (tn, tv), 1)
              == local).astype(x_aug.dtype)               # (tn, tv)
    # Single MXU pass: per-segment feature sums AND counts (last column).
    acc_ref[...] += jax.lax.dot_general(
        onehot, x_aug,
        dimension_numbers=(((0,), (0,)), ((), ())),
        preferred_element_type=jnp.float32)               # (tv, f+1)

    @pl.when(r == pl.num_programs(1) - 1)
    def _finalize():
        acc = acc_ref[...]
        o_ref[...] = (init_val + acc[:, :f]) / jnp.maximum(acc[:, f:f + 1], 1.0)


def scatter_mean(x, idx, num_segments, init_val=0.0,
                 compute_dtype=jnp.float32, *, tn_max=None, tv_max=None):
    """Segment mean via tiled one-hot @ [x | 1].

    Grid is (segment_tiles, row_tiles): segment axis 'parallel' (both v7x
    TensorCores, private accumulator per tile, disjoint outputs), row axis is
    the reduction.  The (tn, tv) one-hot intermediate is capped by the
    generation-keyed tile sizes so it fits v7x's 64 MiB VMEM.
    """
    n, f = x.shape
    v = int(num_segments)
    cfg = _tile_config()
    tn_max = cfg["sm_tn"] if tn_max is None else tn_max
    tv_max = cfg["sm_tv"] if tv_max is None else tv_max

    tv, v_pad = _bucket_segments(v, tv_max)
    tn, n_pad = _bucket_rows(n, tn_max)

    cd = jnp.dtype(compute_dtype)
    # [x | 1] built once in the wrapper; padded rows carry the sentinel index
    # v_pad -> never match any segment tile -> zero contribution.
    x_aug = jnp.zeros((n_pad, f + 1), cd)
    x_aug = x_aug.at[:n, :f].set(x.astype(cd)).at[:n, f].set(1.0)
    idx_p = jnp.full((n_pad, 1), v_pad, jnp.int32)
    idx_p = idx_p.at[:n, 0].set(idx.astype(jnp.int32))

    bc = cd.itemsize
    est = (2 * (tn * (f + 1) * bc + tn * 4)   # double-buffered row tiles
           + tn * tv * bc                     # in-kernel one-hot
           + tv * (f + 1) * 4                 # accumulator
           + tv * f * 4)                      # output tile
    out = pl.pallas_call(
        functools.partial(_scatter_mean_kernel, f=f, tv=tv,
                          init_val=float(init_val)),
        out_shape=jax.ShapeDtypeStruct((v_pad, f), jnp.float32),
        grid=(v_pad // tv, n_pad // tn),
        in_specs=[pl.BlockSpec((tn, f + 1), lambda sv, r: (r, 0)),
                  pl.BlockSpec((tn, 1), lambda sv, r: (r, 0))],
        out_specs=pl.BlockSpec((tv, f), lambda sv, r: (sv, 0)),
        scratch_shapes=[pltpu.VMEM((tv, f + 1), jnp.float32)],
        compiler_params=pltpu.CompilerParams(
            dimension_semantics=("parallel", "arbitrary"),
            vmem_limit_bytes=_vmem_limit(est)),
    )(x_aug, idx_p)
    # TODO(synk): for very large num_segments replace the O(n*V*f) one-hot
    # matmul with a sort-based contiguous segment sum (PrefetchScalarGridSpec
    # with per-tile segment offsets).
    return out[:v]


# ----------------------------------------------------------------------------
# Nearest same-batch superpoint with fused argmin (mask folded into the matmul)
# ----------------------------------------------------------------------------
def _nearest_kernel(pq_ref, sq_ref, col_ref, o_ref, minval_ref, minidx_ref):
    j = pl.program_id(1)

    @pl.when(j == 0)
    def _init():
        minval_ref[...] = jnp.full_like(minval_ref, jnp.inf)
        minidx_ref[...] = jnp.zeros_like(minidx_ref)

    # score_ij = |s_j|^2 - 2 p_i.s_j + BIG*[batch(i) != batch(j) or j padded]
    # (the row-constant |p_i|^2 cannot change the argmin).  ONE matmul on
    # augmented coords; the batch mask rides in extra one-hot penalty columns,
    # so there is no per-tile VPU compare/select mask pass.
    score = jax.lax.dot_general(
        pq_ref[...], sq_ref[...],
        dimension_numbers=(((1,), (1,)), ((), ())),
        preferred_element_type=jnp.float32)                   # (tn, tv)

    # Running (value, index) min carried in scratch: tile-min (XLU), one cmp +
    # one select (VPU), col-min (XLU) per tile -- no local-argmin bookkeeping.
    tile_min = jnp.min(score, axis=1, keepdims=True)          # (tn, 1)
    run_min = jnp.minimum(minval_ref[...], tile_min)
    big_i = jnp.int32(2 ** 30)
    cand = jnp.min(jnp.where(score <= run_min, col_ref[...], big_i),
                   axis=1, keepdims=True)                     # (tn, 1)
    minidx_ref[...] = jnp.where(cand < big_i, cand, minidx_ref[...])
    minval_ref[...] = run_min

    @pl.when(j == pl.num_programs(1) - 1)
    def _write():
        o_ref[...] = minidx_ref[...]


def nearest(pos, superpoint, batch_pos, batch_sp, *, tn_max=None, tv_max=None):
    """torch_geometric.nn.nearest: nearest same-batch superpoint per point.

    Argmin fused in-kernel (only (n,) int32 leaves VMEM); the (n, V) distance
    matrix never touches HBM.  Ties between exactly equidistant superpoints
    may break differently from torch (any nearest superpoint is returned) --
    semantically equivalent for the clustering that consumes it.
    """
    n, d = pos.shape
    v = superpoint.shape[0]
    cfg = _tile_config()
    tn_max = cfg["nn_tn"] if tn_max is None else tn_max
    tv_max = cfg["nn_tv"] if tv_max is None else tv_max
    tn, n_pad = _bucket_rows(n, tn_max)
    tv, v_pad = _bucket_segments(v, tv_max)

    pos32 = pos.astype(jnp.float32)
    sp32 = superpoint.astype(jnp.float32)
    # Global centering (distances are translation invariant) keeps the
    # |s|^2 - 2 p.s formulation well conditioned.
    center = jnp.mean(pos32, axis=0, keepdims=True)
    p_c = pos32 - center
    s_c = sp32 - center
    pmax2 = jnp.max(jnp.sum(p_c * p_c, axis=1))
    smax2 = jnp.max(jnp.sum(s_c * s_c, axis=1))
    big = 8.0 * (pmax2 + smax2) + 1.0      # dominates any true score delta

    nb = int(jnp.max(batch_pos)) + 1 if n > 0 else 1
    ncls = nb + 1                          # class nb = padded superpoints
    d_aug = _round_up(d + 1 + ncls, 8)     # K <= ~128 is essentially free on MXU

    pq = jnp.zeros((n_pad, d_aug), jnp.float32)
    pq = pq.at[:n, :d].set(p_c).at[:n, d].set(1.0)
    p1h = jax.nn.one_hot(batch_pos.astype(jnp.int32), ncls, dtype=jnp.float32)
    pq = pq.at[:n, d + 1:d + 1 + ncls].set(big * (1.0 - p1h))

    sq = jnp.zeros((v_pad, d_aug), jnp.float32)
    sq = sq.at[:v, :d].set(-2.0 * s_c)
    sq = sq.at[:v, d].set(jnp.sum(s_c * s_c, axis=1))
    bs_full = jnp.full((v_pad,), nb, jnp.int32)
    bs_full = bs_full.at[:v].set(batch_sp.astype(jnp.int32))
    sq = sq.at[:, d + 1:d + 1 + ncls].set(
        jax.nn.one_hot(bs_full, ncls, dtype=jnp.float32))

    colv = jnp.arange(v_pad, dtype=jnp.int32).reshape(1, v_pad)

    est = (2 * (tn * d_aug * 4 + tv * d_aug * 4 + tv * 4 + tn * 4)
           + tn * tv * 4 + 2 * tn * 4)
    out = pl.pallas_call(
        _nearest_kernel,
        out_shape=jax.ShapeDtypeStruct((n_pad, 1), jnp.int32),
        grid=(n_pad // tn, v_pad // tv),
        in_specs=[pl.BlockSpec((tn, d_aug), lambda i, j: (i, 0)),
                  pl.BlockSpec((tv, d_aug), lambda i, j: (j, 0)),
                  pl.BlockSpec((1, tv), lambda i, j: (0, j))],
        out_specs=pl.BlockSpec((tn, 1), lambda i, j: (i, 0)),
        scratch_shapes=[pltpu.VMEM((tn, 1), jnp.float32),
                        pltpu.VMEM((tn, 1), jnp.int32)],
        compiler_params=pltpu.CompilerParams(
            dimension_semantics=("parallel", "arbitrary"),
            vmem_limit_bytes=_vmem_limit(est)),
    )(pq, sq, colv)
    return out[:n, 0]


# ----------------------------------------------------------------------------
# Plain-JAX glue (data-dependent / irregular parts, run eagerly)
# ----------------------------------------------------------------------------
def consecutive_cluster(src):
    # torch_geometric.nn.pool.consecutive.consecutive_cluster
    # TODO(synk): for fully static shapes under jit, switch to
    # jnp.unique(..., size=MAX_CLUSTERS); pow2 bucketing in the kernels already
    # limits recompiles from varying cluster counts.
    uniq, inv = jnp.unique(src, return_inverse=True)
    inv = inv.reshape(-1).astype(jnp.int32)
    n_clusters = int(uniq.shape[0])
    # perm[c] = representative node of cluster c.  NOTE: torch's scatter_
    # overwrite picks a different representative, but only batch[perm] is
    # consumed and all members of a cluster share the same batch id.
    perm = jax.ops.segment_max(jnp.arange(src.shape[0], dtype=jnp.int32),
                               inv, num_segments=n_clusters)
    return inv, perm, n_clusters


def voxel_grid_cluster(pos, batch, size, start, end):
    # grouping identical to torch_geometric.nn.voxel_grid (batch is an extra
    # voxel coordinate); raw ids may differ, consecutive_cluster relabels anyway.
    # TODO(synk): int32 voxel key can overflow for very fine pool radii / huge
    # extents; promote to a 2-level key if that regime is ever needed.
    coords = jnp.floor((pos - start) / size).astype(jnp.int32)
    dims = jnp.floor((end - start) / size).astype(jnp.int32) + 1
    key = batch.astype(jnp.int32)
    for d in range(pos.shape[1]):
        key = key * dims[d] + coords[:, d]
    return key


def multimodal_group_fusion(b1, b2, pool_rad):
    pos = jnp.concatenate([b1['pos'], b2['pos']], axis=0)
    batch = jnp.concatenate([b1['batch'], b2['batch']], axis=0)
    sorted_indx = jnp.argsort(batch)
    batch = batch[sorted_indx]
    inv_indx = jnp.argsort(sorted_indx)
    pos = pos[sorted_indx, :]

    start = pos.min(axis=0) - pool_rad * 0.5
    end = pos.max(axis=0) + pool_rad * 0.5

    cluster = voxel_grid_cluster(pos, batch, pool_rad, start, end)
    cluster, perm, n_sp = consecutive_cluster(cluster)
    # geometry in f32 to keep superpoint / voxel centers exact
    superpoint = scatter_mean(pos, cluster, n_sp, init_val=0.0,
                              compute_dtype=jnp.float32)
    new_batch = batch[perm]

    cluster = nearest(pos, superpoint, batch, new_batch)
    cluster, perm, n_voxels = consecutive_cluster(cluster)
    pos = scatter_mean(pos, cluster, n_voxels, init_val=0.0,
                       compute_dtype=jnp.float32)

    n1 = b1['batch'].shape[0]
    cluster = cluster[inv_indx]
    # scatter(..., out=torch.ones(nVoxels, F), reduce='mean') == (1+sum)/max(c,1)
    # bf16 one-hot/features: 0/1 exact in bf16, halves VMEM/HBM bytes, uses the
    # bf16 MXU path; accumulation stays f32.
    x_b1 = scatter_mean(b1['x'], cluster[:n1], n_voxels, init_val=1.0,
                        compute_dtype=jnp.bfloat16)
    x_b2 = scatter_mean(b2['x'], cluster[n1:], n_voxels, init_val=1.0,
                        compute_dtype=jnp.bfloat16)
    x = jnp.concatenate([x_b1, x_b2], axis=1)
    batch = batch[perm]
    return {'x': x, 'pos': pos, 'batch': batch,
            'edge_attr': None, 'edge_index': None}


# ----------------------------------------------------------------------------
# TwoStreamNetwork
# ----------------------------------------------------------------------------
class TwoStreamNetworkPallas:
    def __init__(self, features_b1, features_b2, rad_fuse_pool,
                 features_proj_b1=16, features_proj_b2=16, key=None):
        k1, k2 = jax.random.split(key)
        self.f1, self.f2 = int(features_b1), int(features_b2)
        self.p1, self.p2 = int(features_proj_b1), int(features_proj_b2)
        # Conv1d(Fin, Fout, kernel_size=1, bias=False): weight (Fout, Fin).
        w1 = jax.random.normal(k1, (self.p1, self.f1),
                               jnp.float32) / jnp.sqrt(float(self.f1))
        w2 = jax.random.normal(k2, (self.p2, self.f2),
                               jnp.float32) / jnp.sqrt(float(self.f2))
        # Per-stream weights (no block-diagonal activation zero-padding).
        # Output rows padded to a 128 multiple so projection stores are
        # lane-dense (unmasked vst); real columns sliced off after the call.
        self.p1_pad = _round_up(self.p1, 128)
        self.p2_pad = _round_up(self.p2, 128)
        self.w1 = jnp.zeros((self.p1_pad, self.f1), jnp.float32
                            ).at[:self.p1].set(w1).astype(jnp.bfloat16)
        self.w2 = jnp.zeros((self.p2_pad, self.f2), jnp.float32
                            ).at[:self.p2].set(w2).astype(jnp.bfloat16)
        self.rad_fuse_pool = float(rad_fuse_pool)

    def _project(self, x1, x2):
        # to_dense_batch / permute / 1x1-conv / mask-gather folded into one
        # fused per-node relu+matmul per stream (padding rows stay zero and are
        # dropped again).  bf16 activations/weights; the downstream feature
        # scatter-mean runs in bf16 anyway (validate tolerance vs f32 torch).
        y1 = relu_proj(x1.astype(jnp.bfloat16), self.w1)[:, :self.p1]
        y2 = relu_proj(x2.astype(jnp.bfloat16), self.w2)[:, :self.p2]
        return y1, y2

    def __call__(self, data_b1, data_b2):
        data_b1 = dict(data_b1)
        data_b2 = dict(data_b2)
        data_b1['x'], data_b2['x'] = self._project(data_b1['x'], data_b2['x'])
        data = multimodal_group_fusion(data_b1, data_b2, self.rad_fuse_pool)
        # TODO(synk): models.GraphNetwork(graph_net_conf, ...) classifier head
        # is not defined in the reference source, so the fused graph is returned.
        return data


# ----------------------------------------------------------------------------
if __name__ == "__main__":
    key = jax.random.PRNGKey(0)
    k_x1, k_x2, k_p1, k_p2, k_w = jax.random.split(key, 5)

    B = 2                      # graphs per batch
    n_per_b1, n_per_b2 = 6, 5  # nodes per graph
    F1, F2 = 8, 6              # input feature dims
    N1, N2 = B * n_per_b1, B * n_per_b2

    data_b1 = {
        'x': jax.random.normal(k_x1, (N1, F1), jnp.float32),
        'pos': jax.random.uniform(k_p1, (N1, 3), jnp.float32, 0.0, 2.0),
        'batch': jnp.repeat(jnp.arange(B, dtype=jnp.int32), n_per_b1),
    }
    data_b2 = {
        'x': jax.random.normal(k_x2, (N2, F2), jnp.float32),
        'pos': jax.random.uniform(k_p2, (N2, 3), jnp.float32, 0.0, 2.0),
        'batch': jnp.repeat(jnp.arange(B, dtype=jnp.int32), n_per_b2),
    }

    net = TwoStreamNetworkPallas(features_b1=F1, features_b2=F2,
                                 rad_fuse_pool=1.0,
                                 features_proj_b1=16, features_proj_b2=16,
                                 key=k_w)
    out = net(data_b1, data_b2)

    jax.block_until_ready(out['x'])
    jax.block_until_ready(out['pos'])
    jax.block_until_ready(out['batch'])
    assert out['x'].shape == (out['pos'].shape[0], 32)
    assert out['pos'].shape[1] == 3
    assert out['batch'].shape[0] == out['pos'].shape[0]
    print("KERNEL_OK")
</pallas_src>

<mosaic_0001>
module attributes {stable_mosaic.version = 11 : i64} {
  func.func @_relu_proj_kernel(%arg0: i32, %arg1: memref<16x8xbf16, #tpu.memory_space<vmem>>, %arg2: memref<128x8xbf16, #tpu.memory_space<vmem>>, %arg3: memref<16x128xbf16, #tpu.memory_space<vmem>>) attributes {dimension_semantics = [#tpu.dimension_semantics<parallel>], iteration_bounds = array<i64: 1>, scalar_prefetch = 0 : i64, scratch_operands = 0 : i64, tpu.core_type = #tpu.core_type<tc>, window_params = [{transform_indices = @transform_0, window_bounds = array<i64: 16, 8>}, {pipeline_mode = #tpu.pipeline_mode<synchronous>, transform_indices = @transform_1, window_bounds = array<i64: 128, 8>}, {transform_indices = @transform_2, window_bounds = array<i64: 16, 128>}]} {
    %c0 = arith.constant 0 : index
    %c0_0 = arith.constant 0 : index
    %0 = vector.load %arg1[%c0, %c0_0] : memref<16x8xbf16, #tpu.memory_space<vmem>>, vector<16x8xbf16>
    %1 = arith.extf %0 : vector<16x8xbf16> to vector<16x8xf32>
    %cst = arith.constant 0.000000e+00 : f32
    %2 = vector.broadcast %cst : f32 to vector<16x8xf32>
    %3 = arith.maximumf %1, %2 : vector<16x8xf32>
    %4 = arith.truncf %3 : vector<16x8xf32> to vector<16x8xbf16>
    %c0_1 = arith.constant 0 : index
    %c0_2 = arith.constant 0 : index
    %5 = vector.load %arg2[%c0_1, %c0_2] : memref<128x8xbf16, #tpu.memory_space<vmem>>, vector<128x8xbf16>
    %cst_3 = arith.constant dense<0.000000e+00> : vector<16x128xf32>
    %6 = tpu.matmul %4, %5, %cst_3 {dimension_numbers = #tpu.dot_dimension_numbers<[1], [1], [0], [0], [0, 0, 1, 0], [], []>} : vector<16x8xbf16>, vector<128x8xbf16>, vector<16x128xf32> -> vector<16x128xf32>
    %7 = arith.truncf %6 : vector<16x128xf32> to vector<16x128xbf16>
    %c0_4 = arith.constant 0 : index
    %c0_5 = arith.constant 0 : index
    %8 = vector.load %arg3[%c0_4, %c0_5] : memref<16x128xbf16, #tpu.memory_space<vmem>>, vector<16x128xbf16>
    tpu.vector_store %arg3[%c0_4, %c0_5], %7 {strides = array<i32>} : memref<16x128xbf16, #tpu.memory_space<vmem>>, vector<16x128xbf16>,
    return
  }
  func.func @transform_0(%arg0: i32) -> (i32, i32) {
    %c0_i32 = arith.constant 0 : i32
    %c0_i32_0 = arith.constant 0 : i32
    return %arg0, %c0_i32 : i32, i32
  }
  func.func @transform_1(%arg0: i32) -> (i32, i32) {
    %c0_i32 = arith.constant 0 : i32
    %c0_i32_0 = arith.constant 0 : i32
    %c0_i32_1 = arith.constant 0 : i32
    return %c0_i32, %c0_i32_0 : i32, i32
  }
  func.func @transform_2(%arg0: i32) -> (i32, i32) {
    %c0_i32 = arith.constant 0 : i32
    %c0_i32_0 = arith.constant 0 : i32
    return %arg0, %c0_i32 : i32, i32
  }
}

</mosaic_0001>

<llo_original>
// kernel: tpu_custom_call.1
$region0: #{tpu_custom_call.1}
  #allocation0 [shape = 'u32[]', space=smem, size = 0x4, offset = 0x4, fixed_abs, tag = 'smem constant byte address 0x4 - core index']
  #allocation1 [shape = 'u32[144,128]{1,0:T(1,128)}', space=vmem, size = 0x12000, scoped, tag = 'internal scratch']
  %s0 = inlined_call_operand.vmem [shape: bf16[12,8], index: 0, kind: input, shape index: {}]
  %s1 = inlined_call_operand.vmem [shape: bf16[128,8], index: 1, kind: input, shape index: {}]
  %s2 = inlined_call_operand.hbm [shape: bf16[12,128], index: 2, kind: output, shape index: {}]
  %s3 = sld [smem:[#allocation0]]
  $region18: #{tpu_custom_call.1} parent=0
    _
  %s5 = ssub.s32 1, %s3
  %s6 = scalar_select 0, %s5, %s3
  $region1: #{tpu_custom_call.1} parent=0
    #allocation2 [shape = 'u8[4096]{0}', space=vmem, size = 0x1000, scoped, tag = 'output window, operand 0, single buffered']
    #allocation3 [shape = 's32[1]{0}', space=sflag, size = 0x4, scoped, tag = 'scoped memory for tpu_custom_call.1']
    %7 = vsyncpa [#allocation3], 0
    // Predicated region
    $region2: #{tpu_custom_call.1} parent=1 // pred_check
      _
    $region3: #{tpu_custom_call.1} parent=1 // pred_check_branch
      %9 = sbr.rel (0) target = $region5
    $region4: #{tpu_custom_call.1} parent=1 // pred_region
      _
    $region5: #{tpu_custom_call.1} parent=1 // pred_fallthru
      _
    // Predicated region
    $region6: #{tpu_custom_call.1} parent=1 // pred_check
      _
    $region7: #{tpu_custom_call.1} parent=1 // pred_check_branch
      %11 = sbr.rel (0) target = $region9
    $region8: #{tpu_custom_call.1} parent=1 // pred_region
      _
    $region9: #{tpu_custom_call.1} parent=1 // pred_fallthru
      _
    %v13 = vld [vmem:[%s0] sm:$0xf]
    %v14 = vld [vmem:[%s0 + $0x4] sm:$0xf]
    %v15 = vunpack.c.l.bf16 %v13
    %v16 = vunpack.c.l.bf16 %v14
    %v17 = vmax.f32 %v15, 0.0
    %v18 = vmax.f32 %v16, 0.0
    %v19 = vpack.c.bf16 %v18, %v17
    %v20 = vld [vmem:[%s1] sm:$0xf]
    %v21 = vld [vmem:[%s1 + $0x4] sm:$0xf]
    %v22 = vld [vmem:[%s1 + $0x8] sm:$0xf]
    %v23 = vld [vmem:[%s1 + $0xc] sm:$0xf]
    %v24 = vld [vmem:[%s1 + $0x10] sm:$0xf]
    %v25 = vld [vmem:[%s1 + $0x14] sm:$0xf]
    %v26 = vld [vmem:[%s1 + $0x18] sm:$0xf]
    %v27 = vld [vmem:[%s1 + $0x1c] sm:$0xf]
    %v28 = vld [vmem:[%s1 + $0x20] sm:$0xf]
    %v29 = vld [vmem:[%s1 + $0x24] sm:$0xf]
    %v30 = vld [vmem:[%s1 + $0x28] sm:$0xf]
    %v31 = vld [vmem:[%s1 + $0x2c] sm:$0xf]
    %v32 = vld [vmem:[%s1 + $0x30] sm:$0xf]
    %v33 = vld [vmem:[%s1 + $0x34] sm:$0xf]
    %v34 = vld [vmem:[%s1 + $0x38] sm:$0xf]
    %v35 = vld [vmem:[%s1 + $0x3c] sm:$0xf]
    %v52 = vunpack.c.l.b16 %v20
    %v53 = vunpack.c.l.b16 %v21
    %v54 = vunpack.c.l.b16 %v22
    %v55 = vunpack.c.l.b16 %v23
    %v56 = vunpack.c.l.b16 %v24
    %v57 = vunpack.c.l.b16 %v25
    %v58 = vunpack.c.l.b16 %v26
    %v59 = vunpack.c.l.b16 %v27
    %v60 = vunpack.c.l.b16 %v28
    %v61 = vunpack.c.l.b16 %v29
    %v62 = vunpack.c.l.b16 %v30
    %v63 = vunpack.c.l.b16 %v31
    %v64 = vunpack.c.l.b16 %v32
    %v65 = vunpack.c.l.b16 %v33
    %v66 = vunpack.c.l.b16 %v34
    %v67 = vunpack.c.l.b16 %v35
    %v68 = vpack.c.b16 %v53, %v52
    %v69 = vpack.c.b16 %v55, %v54
    %v70 = vpack.c.b16 %v57, %v56
    %v71 = vpack.c.b16 %v59, %v58
    %v72 = vpack.c.b16 %v61, %v60
    %v73 = vpack.c.b16 %v63, %v62
    %v74 = vpack.c.b16 %v65, %v64
    %v75 = vpack.c.b16 %v67, %v66
    %vm76 = vcmask 64512
    %v78 = vsel %vm76, %v19, 0
    %v81 = vsel %vm76, %v68, 0
    %v84 = vsel %vm76, %v69, 0
    %v87 = vsel %vm76, %v70, 0
    %v90 = vsel %vm76, %v71, 0
    %v93 = vsel %vm76, %v72, 0
    %v96 = vsel %vm76, %v73, 0
    %v99 = vsel %vm76, %v74, 0
    %v102 = vsel %vm76, %v75, 0
    %104 = vmatprep.subr.bf16.mxu0 0
    %105 = vmatpush1.bf16.xpose.msra.mxu0 %v81
    %106 = vmatprep.subr.bf16.mxu0 0
    %107 = vmatpush1.bf16.xpose.msra.mxu0 %v84
    %108 = vmatprep.subr.bf16.mxu0 0
    %109 = vmatpush1.bf16.xpose.msra.mxu0 %v87
    %110 = vmatprep.subr.bf16.mxu0 0
    %111 = vmatpush1.bf16.xpose.msra.mxu0 %v90
    %112 = vmatprep.subr.bf16.mxu0 0
    %113 = vmatpush1.bf16.xpose.msra.mxu0 %v93
    %114 = vmatprep.subr.bf16.mxu0 0
    %115 = vmatpush1.bf16.xpose.msra.mxu0 %v96
    %116 = vmatprep.subr.bf16.mxu0 0
    %117 = vmatpush1.bf16.xpose.msra.mxu0 %v99
    %118 = vmatprep.subr.bf16.mxu0 0
    %119 = vmatpush1.bf16.xpose.msra.mxu0 %v102
    %120 = vmatprep.subr.bf16.mxu0 0
    %121 = vmatpush1.bf16.xpose.msra.mxu0 0
    %122 = vmatprep.subr.bf16.mxu0 0
    %123 = vmatpush1.bf16.xpose.msra.mxu0 0
    %124 = vmatprep.subr.bf16.mxu0 0
    %125 = vmatpush1.bf16.xpose.msra.mxu0 0
    %126 = vmatprep.subr.bf16.mxu0 0
    %127 = vmatpush1.bf16.xpose.msra.mxu0 0
    %128 = vmatprep.subr.bf16.mxu0 0
    %129 = vmatpush1.bf16.xpose.msra.mxu0 0
    %130 = vmatprep.subr.bf16.mxu0 0
    %131 = vmatpush1.bf16.xpose.msra.mxu0 0
    %132 = vmatprep.subr.bf16.mxu0 0
    %133 = vmatpush1.bf16.xpose.msra.mxu0 0
    %134 = vmatprep.subr.bf16.mxu0 0
    %135 = vmatpush1.bf16.xpose.msra.mxu0 0
    %136 = vmatprep.mubr.bf16.mxu0 0
    %137 = vmatmul.mubr.bf16.gmra.mrb[0].mxu0 %v78
    %v138 = vpop.f32.mrb[0].mxu0
    %v139 = vadd.f32 0.0, %v138
    %v140 = vpop.f32.mrb[0].mxu0
    %v141 = vpop.f32.mrb[0].mxu0
    %v142 = vadd.f32 0.0, %v141
    %v143 = vpop.f32.mrb[0].mxu0
    %144 = vdwg.mxu0
    %v145 = vpack.c.bf16 %v142, %v139
    %v147 = vunpack.c.l.b16 %v145
    %v148 = vunpack.c.h.b16 %v145
    %v149 = vpack.c.b16 %v147, %v147
    %v150 = vpack.c.b16 %v148, %v148
    %153 = vst [vmem:[#allocation2] sm:$0xf] %v149
    %154 = vst [vmem:[#allocation2 + $0x4] sm:$0xf] %v150
    // Predicated region
    $region10: #{tpu_custom_call.1} parent=1 // pred_check
      _
    $region11: #{tpu_custom_call.1} parent=1 // pred_check_branch
      %156 = sbr.rel (0) target = $region13
    $region12: #{tpu_custom_call.1} parent=1 // pred_region
      %s158 = ssub.s32 128, 128
      %159 = vsyncadd [#allocation3], %s158
      %s160 = sshll.u32 [#allocation2], 4
      %s161 = int_to_ptr.vmem [resolvable:$true] %s160
      %166 = dma.vmem_to_hbm [thread:$0]  %s161, 128, %s2, [#allocation3], 64, 64, 4
    $region13: #{tpu_custom_call.1} parent=1 // pred_fallthru
      _
    // Predicated region
    $region14: #{tpu_custom_call.1} parent=1 // pred_check
      _
    $region15: #{tpu_custom_call.1} parent=1 // pred_check_branch
      %168 = sbr.rel (0) target = $region17
    $region16: #{tpu_custom_call.1} parent=1 // pred_region
      %169 = dma.done [#allocation3], 128
    $region17: #{tpu_custom_call.1} parent=1 // pred_fallthru
      _
    %170 = vsyncpa [#allocation3], 1

</llo_original>
